<compile_context>
chip_gen: v5e
topology: v5e:2x2
jax: 0.10.0
libtpu: 0.0.40
codegen_flags: <defaults>
</compile_context>

<pallas_src>
import math
import functools

import jax
import jax.numpy as jnp
from jax import lax
from jax.experimental import pallas as pl
from jax.experimental.pallas import tpu as pltpu

_LN_EPS = 1e-5          # torch nn.LayerNorm default
_MASK_NEG = -1e9        # torch reference uses -1000000000.0


def _layernorm(v, g, b):
    mu = jnp.mean(v, axis=-1, keepdims=True)
    var = jnp.mean((v - mu) ** 2, axis=-1, keepdims=True)
    return (v - mu) * lax.rsqrt(var + _LN_EPS) * g + b


# ---------------------------------------------------------------------------
# Kernel 1: LayerNorm + K/V projections, written head-major (B, nh, S, d_k).
# ---------------------------------------------------------------------------
def kv_proj_kernel(x_ref, ln1g_ref, ln1b_ref, wk_ref, bk_ref, wv_ref, bv_ref,
                   k_ref, v_ref, *, num_heads):
    ln = _layernorm(x_ref[...].astype(jnp.float32), ln1g_ref[...], ln1b_ref[...])
    ln = ln.astype(jnp.bfloat16)                                  # (S, H)
    for h in range(num_heads):                                    # once per batch elem
        k_ref[h] = (jnp.dot(ln, wk_ref[h], preferred_element_type=jnp.float32)
                    + bk_ref[h]).astype(jnp.bfloat16)
        v_ref[h] = (jnp.dot(ln, wv_ref[h], preferred_element_type=jnp.float32)
                    + bv_ref[h]).astype(jnp.bfloat16)


# ---------------------------------------------------------------------------
# Kernel 2: per query-row tile:  x + MHA(LN(x)),  then  x1 + FFN(LN(x1)).
# ---------------------------------------------------------------------------
def attn_ffn_kernel(xq_ref, k_ref, v_ref, bias_ref,
                    ln1g_ref, ln1b_ref,
                    wq_ref, bq_ref, wo_ref, bo_ref,
                    ln2g_ref, ln2b_ref,
                    w1_ref, b1_ref, w2_ref, b2_ref,
                    o_ref, *, num_heads, scale):
    x_q = xq_ref[...]                                             # (tq, H) f32
    ln1_q = _layernorm(x_q, ln1g_ref[...], ln1b_ref[...]).astype(jnp.bfloat16)
    bias = bias_ref[...]                                          # (tq, S) bf16 (kept bf16)

    def head_body(h, acc):
        # Per-head Q projection: weights are head-major -> leading-axis index only.
        qh = (jnp.dot(ln1_q, wq_ref[h], preferred_element_type=jnp.float32)
              + bq_ref[h]) * scale                                # 1/sqrt(d_k) folded in
        qh = qh.astype(jnp.bfloat16)                              # (tq, d_k)
        kh = k_ref[h]                                             # (S, d_k) bf16
        vh = v_ref[h]                                             # (S, d_k) bf16
        # Contract last dims of both operands -> no kh.T transpose.
        scores = lax.dot_general(qh, kh, (((1,), (1,)), ((), ())),
                                 preferred_element_type=jnp.float32) + bias
        scores = scores - jnp.max(scores, axis=-1, keepdims=True)
        p = jnp.exp(scores)
        p = p * pl.reciprocal(jnp.sum(p, axis=-1, keepdims=True), approx=True)
        pv = jnp.dot(p.astype(jnp.bfloat16), vh,
                     preferred_element_type=jnp.float32)          # (tq, d_k)
        # Apply per-head slice of Wo and accumulate -> no ctx scratch needed.
        return acc + jnp.dot(pv.astype(jnp.bfloat16), wo_ref[h],
                             preferred_element_type=jnp.float32)

    attn = lax.fori_loop(0, num_heads, head_body,
                         jnp.zeros(x_q.shape, jnp.float32), unroll=True)
    x1 = x_q + attn + bo_ref[...]
    # TODO(synk): dropout omitted (eval-mode: identity).

    ln2 = _layernorm(x1, ln2g_ref[...], ln2b_ref[...]).astype(jnp.bfloat16)
    h1 = jnp.dot(ln2, w1_ref[...], preferred_element_type=jnp.float32) + b1_ref[...]
    h1 = jax.nn.gelu(h1, approximate=False)    # exact erf GELU (nn.GELU default)
    ffn = jnp.dot(h1.astype(jnp.bfloat16), w2_ref[...],
                  preferred_element_type=jnp.float32) + b2_ref[...]
    o_ref[...] = x1 + ffn


# ---------------------------------------------------------------------------
# Host-side helpers.
# ---------------------------------------------------------------------------
def _buffered_supported():
    """Narrow feature probe for pipeline_mode=pl.Buffered(1)."""
    if not hasattr(pl, "Buffered"):
        return False
    try:
        pl.BlockSpec((8, 128), lambda i: (0, 0), pipeline_mode=pl.Buffered(1))
        return True
    except TypeError:
        return False


_BUFFERED_OK = _buffered_supported()


def _vmem_cap_bytes():
    try:
        return int(pltpu.get_tpu_info().vmem_capacity_bytes)
    except Exception:
        return 64 * 1024 * 1024          # conservative (v7x-sized) fallback


def _vmem_limit(est_bytes):
    ceiling = int(_vmem_cap_bytes() * 0.80)      # headroom for compiler scratch
    return int(min(ceiling, max(32 * 1024 * 1024, est_bytes * 1.25)))


def _pick_tq(S):
    """Query-row tile: MXU-friendly, multiple of 16 (bf16 sublanes), and small
    enough that the (tq, S) f32 score/softmax temporaries stay spill-free."""
    if S <= 512:
        return S
    budget_elems = (6 * 1024 * 1024) // 12       # ~12 B/elem live in the head loop
    for cand in (512, 256, 128, 64, 32, 16):
        if S % cand == 0 and cand * S <= budget_elems:
            return cand
    for cand in (256, 128, 64, 32, 16, 8):
        if S % cand == 0:
            return cand
    return S


def transformer_layer(x, mask, params, *, num_heads):
    B, S, H = x.shape
    assert H % num_heads == 0
    d_k = H // num_heads
    d_ff = params["w1"].shape[1]
    tq = _pick_tq(S)
    nq = S // tq
    bf16 = jnp.bfloat16

    # ---- host-side prep: bf16 MXU operands, head-major weights, mask bias ----
    x_bf = x.astype(bf16)                        # K/V path (LN stats in f32 in-kernel)
    mask_bias = jnp.where(mask == 0, jnp.float32(_MASK_NEG), 0.0).astype(bf16)

    def head_cols(w):    # (H, H) -> (nh, H, d_k): per-head output columns
        return w.reshape(H, num_heads, d_k).transpose(1, 0, 2).astype(bf16)

    def head_bias(b):    # (1, H) -> (nh, 1, d_k)
        return b.reshape(num_heads, 1, d_k).astype(jnp.float32)

    wq_hm, wk_hm, wv_hm = map(head_cols, (params["wq"], params["wk"], params["wv"]))
    bq_hm, bk_hm, bv_hm = map(head_bias, (params["bq"], params["bk"], params["bv"]))
    wo_hm = params["wo"].reshape(num_heads, d_k, H).astype(bf16)   # per-head input rows
    w1 = params["w1"].astype(bf16)
    w2 = params["w2"].astype(bf16)

    ln1_g, ln1_b = params["ln1_g"], params["ln1_b"]
    ln2_g, ln2_b = params["ln2_g"], params["ln2_b"]
    bo, b1, b2 = params["bo"], params["b1"], params["b2"]

    kv_bytes = 2 * S * H * 2                     # K + V, bf16
    main_w_bytes = (2 * H * H + 2 * H * d_ff) * 2

    cost_main = pl.CostEstimate(
        flops=int(B * (4 * S * H * H + 4 * S * S * H + 4 * S * H * d_ff)),
        transcendentals=int(B * (num_heads * S * S + S * d_ff + 2 * S)),
        bytes_accessed=int(B * (8 * S * H + kv_bytes + 2 * S * S) + main_w_bytes))
    cost_kv = pl.CostEstimate(
        flops=int(B * 4 * S * H * H),
        transcendentals=int(B * 2 * S),
        bytes_accessed=int(B * (2 * S * H + kv_bytes) + 4 * H * H))

    def run(use_buffered):
        wbuf = 1 if use_buffered else 2          # buffering factor for const / per-b blocks
        est_main = (2 * tq * H * 4               # xq stream (double-buffered)
                    + 2 * tq * S * 2             # mask-bias stream
                    + 2 * tq * H * 4             # output stream
                    + wbuf * kv_bytes            # K/V blocks (change only with b)
                    + wbuf * main_w_bytes        # weights
                    + 12 * tq * S                # score/softmax f32 temporaries
                    + 10 * tq * d_ff             # FFN hidden temporaries
                    + 16 * tq * H)               # LN / residual temporaries
        est_kv = (2 * S * H * 2                  # x bf16 stream
                  + 2 * kv_bytes                 # outputs (double-buffered)
                  + wbuf * 4 * H * H             # Wk, Wv (bf16)
                  + 10 * S * H + 8 * S * d_k)    # LN + per-head temporaries

        def cspec(shape, ngrid):                 # constant (grid-invariant) block
            idx = (lambda b: (0,) * len(shape)) if ngrid == 1 \
                else (lambda b, q: (0,) * len(shape))
            if use_buffered:
                return pl.BlockSpec(shape, idx, pipeline_mode=pl.Buffered(1))
            return pl.BlockSpec(shape, idx)

        def kv_in_spec():                        # changes only with b -> single-buffer
            idx = lambda b, q: (b, 0, 0, 0)
            shape = (None, num_heads, S, d_k)
            if use_buffered:
                return pl.BlockSpec(shape, idx, pipeline_mode=pl.Buffered(1))
            return pl.BlockSpec(shape, idx)

        # ---- pass 1: K/V projections (head-major bf16, grid over batch) ----
        kv_shape = jax.ShapeDtypeStruct((B, num_heads, S, d_k), bf16)
        k_hm, v_hm = pl.pallas_call(
            functools.partial(kv_proj_kernel, num_heads=num_heads),
            out_shape=(kv_shape, kv_shape),
            grid=(B,),
            in_specs=[
                pl.BlockSpec((None, S, H), lambda b: (b, 0, 0)),
                cspec((1, H), 1), cspec((1, H), 1),
                cspec((num_heads, H, d_k), 1), cspec((num_heads, 1, d_k), 1),
                cspec((num_heads, H, d_k), 1), cspec((num_heads, 1, d_k), 1),
            ],
            out_specs=(
                pl.BlockSpec((None, num_heads, S, d_k), lambda b: (b, 0, 0, 0)),
                pl.BlockSpec((None, num_heads, S, d_k), lambda b: (b, 0, 0, 0)),
            ),
            compiler_params=pltpu.CompilerParams(
                dimension_semantics=("parallel",),
                vmem_limit_bytes=_vmem_limit(est_kv)),
            cost_estimate=cost_kv,
        )(x_bf, ln1_g, ln1_b, wk_hm, bk_hm, wv_hm, bv_hm)

        # ---- pass 2: attention + FFN over (batch, query-row tile) ----
        return pl.pallas_call(
            functools.partial(attn_ffn_kernel, num_heads=num_heads,
                              scale=1.0 / math.sqrt(d_k)),
            out_shape=jax.ShapeDtypeStruct((B, S, H), jnp.float32),
            grid=(B, nq),
            in_specs=[
                pl.BlockSpec((None, tq, H), lambda b, q: (b, q, 0)),   # x (residual, f32)
                kv_in_spec(), kv_in_spec(),                            # K, V head-major
                pl.BlockSpec((None, tq, S), lambda b, q: (b, q, 0)),   # additive mask bias
                cspec((1, H), 2), cspec((1, H), 2),                    # ln1 gamma/beta
                cspec((num_heads, H, d_k), 2), cspec((num_heads, 1, d_k), 2),  # Wq, bq
                cspec((num_heads, d_k, H), 2), cspec((1, H), 2),       # Wo, bo
                cspec((1, H), 2), cspec((1, H), 2),                    # ln2 gamma/beta
                cspec((H, d_ff), 2), cspec((1, d_ff), 2),              # W1, b1
                cspec((d_ff, H), 2), cspec((1, H), 2),                 # W2, b2
            ],
            out_specs=pl.BlockSpec((None, tq, H), lambda b, q: (b, q, 0)),
            compiler_params=pltpu.CompilerParams(
                dimension_semantics=("parallel", "parallel"),
                vmem_limit_bytes=_vmem_limit(est_main)),
            cost_estimate=cost_main,
        )(x, k_hm, v_hm, mask_bias,
          ln1_g, ln1_b, wq_hm, bq_hm, wo_hm, bo,
          ln2_g, ln2_b, w1, b1, w2, b2)

    if _BUFFERED_OK:
        try:
            return run(use_buffered=True)
        except Exception as e:   # condition-specific: only pipeline_mode rejections
            msg = str(e).lower()
            if "pipeline_mode" not in msg and "buffered" not in msg:
                raise
            return run(use_buffered=False)
    return run(use_buffered=False)


# ---------------------------------------------------------------------------
# Parameters + pure-JAX reference (mirrors the PyTorch module, eval mode).
# ---------------------------------------------------------------------------
def make_params(key, hidden_size, num_heads, d_ff):
    H = hidden_size
    ks = jax.random.split(key, 12)
    n = lambda k, shape: (jax.random.normal(k, shape, jnp.float32) * 0.02)
    # Linear weights stored as (in_features, out_features) so the kernel does x @ W.
    return {
        "ln1_g": jnp.ones((1, H), jnp.float32),
        "ln1_b": jnp.zeros((1, H), jnp.float32),
        "wq": n(ks[0], (H, H)), "bq": n(ks[1], (1, H)),
        "wk": n(ks[2], (H, H)), "bk": n(ks[3], (1, H)),
        "wv": n(ks[4], (H, H)), "bv": n(ks[5], (1, H)),
        "wo": n(ks[6], (H, H)), "bo": n(ks[7], (1, H)),
        "ln2_g": jnp.ones((1, H), jnp.float32),
        "ln2_b": jnp.zeros((1, H), jnp.float32),
        "w1": n(ks[8], (H, d_ff)), "b1": n(ks[9], (1, d_ff)),
        "w2": n(ks[10], (d_ff, H)), "b2": n(ks[11], (1, H)),
    }


def transformer_layer_ref(x, mask, params, *, num_heads):
    B, S, H = x.shape
    d_k = H // num_heads

    def ln(v, g, b):
        mu = v.mean(-1, keepdims=True)
        var = ((v - mu) ** 2).mean(-1, keepdims=True)
        return (v - mu) / jnp.sqrt(var + _LN_EPS) * g + b

    nx = ln(x, params["ln1_g"], params["ln1_b"])
    split = lambda t: t.reshape(B, S, num_heads, d_k).transpose(0, 2, 1, 3)
    q = split(nx @ params["wq"] + params["bq"])
    k = split(nx @ params["wk"] + params["bk"])
    v = split(nx @ params["wv"] + params["bv"])
    scores = (q @ k.transpose(0, 1, 3, 2)) / math.sqrt(d_k)
    scores = jnp.where(mask[:, None, :, :] == 0, _MASK_NEG, scores)
    p = jax.nn.softmax(scores, axis=-1)
    ctx = (p @ v).transpose(0, 2, 1, 3).reshape(B, S, H)
    x1 = x + ctx @ params["wo"] + params["bo"]
    nx2 = ln(x1, params["ln2_g"], params["ln2_b"])
    ffn = jax.nn.gelu(nx2 @ params["w1"] + params["b1"], approximate=False)
    return x1 + ffn @ params["w2"] + params["b2"]


if __name__ == "__main__":
    B, S, H = 2, 8, 32
    num_heads, d_ff = 4, 64

    key = jax.random.PRNGKey(0)
    kx, kmask, kp = jax.random.split(key, 3)

    x = jax.random.normal(kx, (B, S, H), jnp.float32)
    # 0/1 attention mask (1 = attend); keep the diagonal so no row is fully masked.
    mask = (jax.random.uniform(kmask, (B, S, S)) > 0.3).astype(jnp.float32)
    mask = jnp.maximum(mask, jnp.eye(S, dtype=jnp.float32)[None, :, :])

    params = make_params(kp, H, num_heads, d_ff)

    out = transformer_layer(x, mask, params, num_heads=num_heads)
    jax.block_until_ready(out)
    assert out.shape == (B, S, H) and out.dtype == jnp.float32
    assert bool(jnp.all(jnp.isfinite(out)))

    ref = transformer_layer_ref(x, mask, params, num_heads=num_heads)
    err = float(jnp.max(jnp.abs(out - ref)))
    assert err < 5e-2, f"max abs error vs reference: {err}"
    print("KERNEL_OK")
</pallas_src>

<mosaic_0001>
module attributes {stable_mosaic.version = 11 : i64} {
  func.func @kv_proj_kernel(%arg0: i32, %arg1: memref<1x8x32xbf16, #tpu.memory_space<vmem>>, %arg2: memref<1x32xf32, #tpu.memory_space<vmem>>, %arg3: memref<1x32xf32, #tpu.memory_space<vmem>>, %arg4: memref<4x32x8xbf16, #tpu.memory_space<vmem>>, %arg5: memref<4x1x8xf32, #tpu.memory_space<vmem>>, %arg6: memref<4x32x8xbf16, #tpu.memory_space<vmem>>, %arg7: memref<4x1x8xf32, #tpu.memory_space<vmem>>, %arg8: memref<1x4x8x8xbf16, #tpu.memory_space<vmem>>, %arg9: memref<1x4x8x8xbf16, #tpu.memory_space<vmem>>) attributes {dimension_semantics = [#tpu.dimension_semantics<parallel>], iteration_bounds = array<i64: 2>, scalar_prefetch = 0 : i64, scratch_operands = 0 : i64, tpu.core_type = #tpu.core_type<tc>, window_params = [{transform_indices = @transform_0, window_bounds = array<i64: 1, 8, 32>}, {pipeline_mode = #tpu.pipeline_mode<synchronous>, transform_indices = @transform_1, window_bounds = array<i64: 1, 32>}, {pipeline_mode = #tpu.pipeline_mode<synchronous>, transform_indices = @transform_2, window_bounds = array<i64: 1, 32>}, {pipeline_mode = #tpu.pipeline_mode<synchronous>, transform_indices = @transform_3, window_bounds = array<i64: 4, 32, 8>}, {pipeline_mode = #tpu.pipeline_mode<synchronous>, transform_indices = @transform_4, window_bounds = array<i64: 4, 1, 8>}, {pipeline_mode = #tpu.pipeline_mode<synchronous>, transform_indices = @transform_5, window_bounds = array<i64: 4, 32, 8>}, {pipeline_mode = #tpu.pipeline_mode<synchronous>, transform_indices = @transform_6, window_bounds = array<i64: 4, 1, 8>}, {transform_indices = @transform_7, window_bounds = array<i64: 1, 4, 8, 8>}, {transform_indices = @transform_8, window_bounds = array<i64: 1, 4, 8, 8>}]} {
    %c0 = arith.constant 0 : index
    %c0_0 = arith.constant 0 : index
    %c0_1 = arith.constant 0 : index
    %0 = vector.load %arg1[%c0, %c0_0, %c0_1] : memref<1x8x32xbf16, #tpu.memory_space<vmem>>, vector<1x8x32xbf16>
    %1 = vector.shape_cast %0 : vector<1x8x32xbf16> to vector<8x32xbf16>
    %2 = arith.extf %1 : vector<8x32xbf16> to vector<8x32xf32>
    %c0_2 = arith.constant 0 : index
    %c0_3 = arith.constant 0 : index
    %3 = vector.load %arg2[%c0_2, %c0_3] : memref<1x32xf32, #tpu.memory_space<vmem>>, vector<1x32xf32>
    %c0_4 = arith.constant 0 : index
    %c0_5 = arith.constant 0 : index
    %4 = vector.load %arg3[%c0_4, %c0_5] : memref<1x32xf32, #tpu.memory_space<vmem>>, vector<1x32xf32>
    %cst = arith.constant dense<0.000000e+00> : vector<8xf32>
    %5 = vector.multi_reduction <add>, %2, %cst [1] : vector<8x32xf32> to vector<8xf32>
    %6 = vector.shape_cast %5 : vector<8xf32> to vector<8x1xf32>
    %cst_6 = arith.constant 3.200000e+01 : f32
    %7 = vector.broadcast %cst_6 : f32 to vector<8x1xf32>
    %8 = arith.divf %6, %7 : vector<8x1xf32>
    %9 = vector.broadcast %8 : vector<8x1xf32> to vector<8x32xf32>
    %10 = arith.subf %2, %9 : vector<8x32xf32>
    %11 = arith.mulf %10, %10 : vector<8x32xf32>
    %cst_7 = arith.constant dense<0.000000e+00> : vector<8xf32>
    %12 = vector.multi_reduction <add>, %11, %cst_7 [1] : vector<8x32xf32> to vector<8xf32>
    %13 = vector.shape_cast %12 : vector<8xf32> to vector<8x1xf32>
    %cst_8 = arith.constant 3.200000e+01 : f32
    %14 = vector.broadcast %cst_8 : f32 to vector<8x1xf32>
    %15 = arith.divf %13, %14 : vector<8x1xf32>
    %16 = vector.broadcast %8 : vector<8x1xf32> to vector<8x32xf32>
    %17 = arith.subf %2, %16 : vector<8x32xf32>
    %cst_9 = arith.constant 9.99999974E-6 : f32
    %18 = vector.broadcast %cst_9 : f32 to vector<8x1xf32>
    %19 = arith.addf %15, %18 : vector<8x1xf32>
    %20 = math.rsqrt %19 : vector<8x1xf32>
    %21 = vector.broadcast %20 : vector<8x1xf32> to vector<8x32xf32>
    %22 = arith.mulf %17, %21 : vector<8x32xf32>
    %23 = vector.broadcast %3 : vector<1x32xf32> to vector<8x32xf32>
    %24 = arith.mulf %22, %23 : vector<8x32xf32>
    %25 = vector.broadcast %4 : vector<1x32xf32> to vector<8x32xf32>
    %26 = arith.addf %24, %25 : vector<8x32xf32>
    %27 = arith.truncf %26 : vector<8x32xf32> to vector<8x32xbf16>
    %c0_10 = arith.constant 0 : index
    %c0_11 = arith.constant 0 : index
    %c0_12 = arith.constant 0 : index
    %28 = vector.load %arg4[%c0_10, %c0_11, %c0_12] : memref<4x32x8xbf16, #tpu.memory_space<vmem>>, vector<1x32x8xbf16>
    %29 = vector.shape_cast %28 : vector<1x32x8xbf16> to vector<32x8xbf16>
    %cst_13 = arith.constant dense<0.000000e+00> : vector<8x8xf32>
    %30 = tpu.matmul %27, %29, %cst_13 {dimension_numbers = #tpu.dot_dimension_numbers<[1], [0], [0], [1], [0, 0, 1, 1], [], []>} : vector<8x32xbf16>, vector<32x8xbf16>, vector<8x8xf32> -> vector<8x8xf32>
    %c0_14 = arith.constant 0 : index
    %c0_15 = arith.constant 0 : index
    %c0_16 = arith.constant 0 : index
    %31 = vector.load %arg5[%c0_14, %c0_15, %c0_16] : memref<4x1x8xf32, #tpu.memory_space<vmem>>, vector<1x1x8xf32>
    %32 = vector.shape_cast %31 : vector<1x1x8xf32> to vector<1x8xf32>
    %33 = vector.broadcast %32 : vector<1x8xf32> to vector<8x8xf32>
    %34 = arith.addf %30, %33 : vector<8x8xf32>
    %35 = arith.truncf %34 : vector<8x8xf32> to vector<8x8xbf16>
    %c0_17 = arith.constant 0 : index
    %c0_18 = arith.constant 0 : index
    %c0_19 = arith.constant 0 : index
    %c0_20 = arith.constant 0 : index
    %36 = vector.load %arg8[%c0_17, %c0_18, %c0_19, %c0_20] : memref<1x4x8x8xbf16, #tpu.memory_space<vmem>>, vector<1x1x8x8xbf16>
    %37 = vector.shape_cast %36 : vector<1x1x8x8xbf16> to vector<8x8xbf16>
    %38 = vector.shape_cast %35 : vector<8x8xbf16> to vector<1x1x8x8xbf16>
    tpu.vector_store %arg8[%c0_17, %c0_18, %c0_19, %c0_20], %38 {strides = array<i32>} : memref<1x4x8x8xbf16, #tpu.memory_space<vmem>>, vector<1x1x8x8xbf16>,
    %c0_21 = arith.constant 0 : index
    %c0_22 = arith.constant 0 : index
    %c0_23 = arith.constant 0 : index
    %39 = vector.load %arg6[%c0_21, %c0_22, %c0_23] : memref<4x32x8xbf16, #tpu.memory_space<vmem>>, vector<1x32x8xbf16>
    %40 = vector.shape_cast %39 : vector<1x32x8xbf16> to vector<32x8xbf16>
    %cst_24 = arith.constant dense<0.000000e+00> : vector<8x8xf32>
    %41 = tpu.matmul %27, %40, %cst_24 {dimension_numbers = #tpu.dot_dimension_numbers<[1], [0], [0], [1], [0, 0, 1, 1], [], []>} : vector<8x32xbf16>, vector<32x8xbf16>, vector<8x8xf32> -> vector<8x8xf32>
    %c0_25 = arith.constant 0 : index
    %c0_26 = arith.constant 0 : index
    %c0_27 = arith.constant 0 : index
    %42 = vector.load %arg7[%c0_25, %c0_26, %c0_27] : memref<4x1x8xf32, #tpu.memory_space<vmem>>, vector<1x1x8xf32>
    %43 = vector.shape_cast %42 : vector<1x1x8xf32> to vector<1x8xf32>
    %44 = vector.broadcast %43 : vector<1x8xf32> to vector<8x8xf32>
    %45 = arith.addf %41, %44 : vector<8x8xf32>
    %46 = arith.truncf %45 : vector<8x8xf32> to vector<8x8xbf16>
    %c0_28 = arith.constant 0 : index
    %c0_29 = arith.constant 0 : index
    %c0_30 = arith.constant 0 : index
    %c0_31 = arith.constant 0 : index
    %47 = vector.load %arg9[%c0_28, %c0_29, %c0_30, %c0_31] : memref<1x4x8x8xbf16, #tpu.memory_space<vmem>>, vector<1x1x8x8xbf16>
    %48 = vector.shape_cast %47 : vector<1x1x8x8xbf16> to vector<8x8xbf16>
    %49 = vector.shape_cast %46 : vector<8x8xbf16> to vector<1x1x8x8xbf16>
    tpu.vector_store %arg9[%c0_28, %c0_29, %c0_30, %c0_31], %49 {strides = array<i32>} : memref<1x4x8x8xbf16, #tpu.memory_space<vmem>>, vector<1x1x8x8xbf16>,
    %c1 = arith.constant 1 : index
    %c0_32 = arith.constant 0 : index
    %c0_33 = arith.constant 0 : index
    %50 = vector.load %arg4[%c1, %c0_32, %c0_33] : memref<4x32x8xbf16, #tpu.memory_space<vmem>>, vector<1x32x8xbf16>
    %51 = vector.shape_cast %50 : vector<1x32x8xbf16> to vector<32x8xbf16>
    %cst_34 = arith.constant dense<0.000000e+00> : vector<8x8xf32>
    %52 = tpu.matmul %27, %51, %cst_34 {dimension_numbers = #tpu.dot_dimension_numbers<[1], [0], [0], [1], [0, 0, 1, 1], [], []>} : vector<8x32xbf16>, vector<32x8xbf16>, vector<8x8xf32> -> vector<8x8xf32>
    %c1_35 = arith.constant 1 : index
    %c0_36 = arith.constant 0 : index
    %c0_37 = arith.constant 0 : index
    %53 = vector.load %arg5[%c1_35, %c0_36, %c0_37] : memref<4x1x8xf32, #tpu.memory_space<vmem>>, vector<1x1x8xf32>
    %54 = vector.shape_cast %53 : vector<1x1x8xf32> to vector<1x8xf32>
    %55 = vector.broadcast %54 : vector<1x8xf32> to vector<8x8xf32>
    %56 = arith.addf %52, %55 : vector<8x8xf32>
    %57 = arith.truncf %56 : vector<8x8xf32> to vector<8x8xbf16>
    %c0_38 = arith.constant 0 : index
    %c1_39 = arith.constant 1 : index
    %c0_40 = arith.constant 0 : index
    %c0_41 = arith.constant 0 : index
    %58 = vector.load %arg8[%c0_38, %c1_39, %c0_40, %c0_41] : memref<1x4x8x8xbf16, #tpu.memory_space<vmem>>, vector<1x1x8x8xbf16>
    %59 = vector.shape_cast %58 : vector<1x1x8x8xbf16> to vector<8x8xbf16>
    %60 = vector.shape_cast %57 : vector<8x8xbf16> to vector<1x1x8x8xbf16>
    tpu.vector_store %arg8[%c0_38, %c1_39, %c0_40, %c0_41], %60 {strides = array<i32>} : memref<1x4x8x8xbf16, #tpu.memory_space<vmem>>, vector<1x1x8x8xbf16>,
    %c1_42 = arith.constant 1 : index
    %c0_43 = arith.constant 0 : index
    %c0_44 = arith.constant 0 : index
    %61 = vector.load %arg6[%c1_42, %c0_43, %c0_44] : memref<4x32x8xbf16, #tpu.memory_space<vmem>>, vector<1x32x8xbf16>
    %62 = vector.shape_cast %61 : vector<1x32x8xbf16> to vector<32x8xbf16>
    %cst_45 = arith.constant dense<0.000000e+00> : vector<8x8xf32>
    %63 = tpu.matmul %27, %62, %cst_45 {dimension_numbers = #tpu.dot_dimension_numbers<[1], [0], [0], [1], [0, 0, 1, 1], [], []>} : vector<8x32xbf16>, vector<32x8xbf16>, vector<8x8xf32> -> vector<8x8xf32>
    %c1_46 = arith.constant 1 : index
    %c0_47 = arith.constant 0 : index
    %c0_48 = arith.constant 0 : index
    %64 = vector.load %arg7[%c1_46, %c0_47, %c0_48] : memref<4x1x8xf32, #tpu.memory_space<vmem>>, vector<1x1x8xf32>
    %65 = vector.shape_cast %64 : vector<1x1x8xf32> to vector<1x8xf32>
    %66 = vector.broadcast %65 : vector<1x8xf32> to vector<8x8xf32>
    %67 = arith.addf %63, %66 : vector<8x8xf32>
    %68 = arith.truncf %67 : vector<8x8xf32> to vector<8x8xbf16>
    %c0_49 = arith.constant 0 : index
    %c1_50 = arith.constant 1 : index
    %c0_51 = arith.constant 0 : index
    %c0_52 = arith.constant 0 : index
    %69 = vector.load %arg9[%c0_49, %c1_50, %c0_51, %c0_52] : memref<1x4x8x8xbf16, #tpu.memory_space<vmem>>, vector<1x1x8x8xbf16>
    %70 = vector.shape_cast %69 : vector<1x1x8x8xbf16> to vector<8x8xbf16>
    %71 = vector.shape_cast %68 : vector<8x8xbf16> to vector<1x1x8x8xbf16>
    tpu.vector_store %arg9[%c0_49, %c1_50, %c0_51, %c0_52], %71 {strides = array<i32>} : memref<1x4x8x8xbf16, #tpu.memory_space<vmem>>, vector<1x1x8x8xbf16>,
    %c2 = arith.constant 2 : index
    %c0_53 = arith.constant 0 : index
    %c0_54 = arith.constant 0 : index
    %72 = vector.load %arg4[%c2, %c0_53, %c0_54] : memref<4x32x8xbf16, #tpu.memory_space<vmem>>, vector<1x32x8xbf16>
    %73 = vector.shape_cast %72 : vector<1x32x8xbf16> to vector<32x8xbf16>
    %cst_55 = arith.constant dense<0.000000e+00> : vector<8x8xf32>
    %74 = tpu.matmul %27, %73, %cst_55 {dimension_numbers = #tpu.dot_dimension_numbers<[1], [0], [0], [1], [0, 0, 1, 1], [], []>} : vector<8x32xbf16>, vector<32x8xbf16>, vector<8x8xf32> -> vector<8x8xf32>
    %c2_56 = arith.constant 2 : index
    %c0_57 = arith.constant 0 : index
    %c0_58 = arith.constant 0 : index
    %75 = vector.load %arg5[%c2_56, %c0_57, %c0_58] : memref<4x1x8xf32, #tpu.memory_space<vmem>>, vector<1x1x8xf32>
    %76 = vector.shape_cast %75 : vector<1x1x8xf32> to vector<1x8xf32>
    %77 = vector.broadcast %76 : vector<1x8xf32> to vector<8x8xf32>
    %78 = arith.addf %74, %77 : vector<8x8xf32>
    %79 = arith.truncf %78 : vector<8x8xf32> to vector<8x8xbf16>
    %c0_59 = arith.constant 0 : index
    %c2_60 = arith.constant 2 : index
    %c0_61 = arith.constant 0 : index
    %c0_62 = arith.constant 0 : index
    %80 = vector.load %arg8[%c0_59, %c2_60, %c0_61, %c0_62] : memref<1x4x8x8xbf16, #tpu.memory_space<vmem>>, vector<1x1x8x8xbf16>
    %81 = vector.shape_cast %80 : vector<1x1x8x8xbf16> to vector<8x8xbf16>
    %82 = vector.shape_cast %79 : vector<8x8xbf16> to vector<1x1x8x8xbf16>
    tpu.vector_store %arg8[%c0_59, %c2_60, %c0_61, %c0_62], %82 {strides = array<i32>} : memref<1x4x8x8xbf16, #tpu.memory_space<vmem>>, vector<1x1x8x8xbf16>,
    %c2_63 = arith.constant 2 : index
    %c0_64 = arith.constant 0 : index
    %c0_65 = arith.constant 0 : index
    %83 = vector.load %arg6[%c2_63, %c0_64, %c0_65] : memref<4x32x8xbf16, #tpu.memory_space<vmem>>, vector<1x32x8xbf16>
    %84 = vector.shape_cast %83 : vector<1x32x8xbf16> to vector<32x8xbf16>
    %cst_66 = arith.constant dense<0.000000e+00> : vector<8x8xf32>
    %85 = tpu.matmul %27, %84, %cst_66 {dimension_numbers = #tpu.dot_dimension_numbers<[1], [0], [0], [1], [0, 0, 1, 1], [], []>} : vector<8x32xbf16>, vector<32x8xbf16>, vector<8x8xf32> -> vector<8x8xf32>
    %c2_67 = arith.constant 2 : index
    %c0_68 = arith.constant 0 : index
    %c0_69 = arith.constant 0 : index
    %86 = vector.load %arg7[%c2_67, %c0_68, %c0_69] : memref<4x1x8xf32, #tpu.memory_space<vmem>>, vector<1x1x8xf32>
    %87 = vector.shape_cast %86 : vector<1x1x8xf32> to vector<1x8xf32>
    %88 = vector.broadcast %87 : vector<1x8xf32> to vector<8x8xf32>
    %89 = arith.addf %85, %88 : vector<8x8xf32>
    %90 = arith.truncf %89 : vector<8x8xf32> to vector<8x8xbf16>
    %c0_70 = arith.constant 0 : index
    %c2_71 = arith.constant 2 : index
    %c0_72 = arith.constant 0 : index
    %c0_73 = arith.constant 0 : index
    %91 = vector.load %arg9[%c0_70, %c2_71, %c0_72, %c0_73] : memref<1x4x8x8xbf16, #tpu.memory_space<vmem>>, vector<1x1x8x8xbf16>
    %92 = vector.shape_cast %91 : vector<1x1x8x8xbf16> to vector<8x8xbf16>
    %93 = vector.shape_cast %90 : vector<8x8xbf16> to vector<1x1x8x8xbf16>
    tpu.vector_store %arg9[%c0_70, %c2_71, %c0_72, %c0_73], %93 {strides = array<i32>} : memref<1x4x8x8xbf16, #tpu.memory_space<vmem>>, vector<1x1x8x8xbf16>,
    %c3 = arith.constant 3 : index
    %c0_74 = arith.constant 0 : index
    %c0_75 = arith.constant 0 : index
    %94 = vector.load %arg4[%c3, %c0_74, %c0_75] : memref<4x32x8xbf16, #tpu.memory_space<vmem>>, vector<1x32x8xbf16>
    %95 = vector.shape_cast %94 : vector<1x32x8xbf16> to vector<32x8xbf16>
    %cst_76 = arith.constant dense<0.000000e+00> : vector<8x8xf32>
    %96 = tpu.matmul %27, %95, %cst_76 {dimension_numbers = #tpu.dot_dimension_numbers<[1], [0], [0], [1], [0, 0, 1, 1], [], []>} : vector<8x32xbf16>, vector<32x8xbf16>, vector<8x8xf32> -> vector<8x8xf32>
    %c3_77 = arith.constant 3 : index
    %c0_78 = arith.constant 0 : index
    %c0_79 = arith.constant 0 : index
    %97 = vector.load %arg5[%c3_77, %c0_78, %c0_79] : memref<4x1x8xf32, #tpu.memory_space<vmem>>, vector<1x1x8xf32>
    %98 = vector.shape_cast %97 : vector<1x1x8xf32> to vector<1x8xf32>
    %99 = vector.broadcast %98 : vector<1x8xf32> to vector<8x8xf32>
    %100 = arith.addf %96, %99 : vector<8x8xf32>
    %101 = arith.truncf %100 : vector<8x8xf32> to vector<8x8xbf16>
    %c0_80 = arith.constant 0 : index
    %c3_81 = arith.constant 3 : index
    %c0_82 = arith.constant 0 : index
    %c0_83 = arith.constant 0 : index
    %102 = vector.load %arg8[%c0_80, %c3_81, %c0_82, %c0_83] : memref<1x4x8x8xbf16, #tpu.memory_space<vmem>>, vector<1x1x8x8xbf16>
    %103 = vector.shape_cast %102 : vector<1x1x8x8xbf16> to vector<8x8xbf16>
    %104 = vector.shape_cast %101 : vector<8x8xbf16> to vector<1x1x8x8xbf16>
    tpu.vector_store %arg8[%c0_80, %c3_81, %c0_82, %c0_83], %104 {strides = array<i32>} : memref<1x4x8x8xbf16, #tpu.memory_space<vmem>>, vector<1x1x8x8xbf16>,
    %c3_84 = arith.constant 3 : index
    %c0_85 = arith.constant 0 : index
    %c0_86 = arith.constant 0 : index
    %105 = vector.load %arg6[%c3_84, %c0_85, %c0_86] : memref<4x32x8xbf16, #tpu.memory_space<vmem>>, vector<1x32x8xbf16>
    %106 = vector.shape_cast %105 : vector<1x32x8xbf16> to vector<32x8xbf16>
    %cst_87 = arith.constant dense<0.000000e+00> : vector<8x8xf32>
    %107 = tpu.matmul %27, %106, %cst_87 {dimension_numbers = #tpu.dot_dimension_numbers<[1], [0], [0], [1], [0, 0, 1, 1], [], []>} : vector<8x32xbf16>, vector<32x8xbf16>, vector<8x8xf32> -> vector<8x8xf32>
    %c3_88 = arith.constant 3 : index
    %c0_89 = arith.constant 0 : index
    %c0_90 = arith.constant 0 : index
    %108 = vector.load %arg7[%c3_88, %c0_89, %c0_90] : memref<4x1x8xf32, #tpu.memory_space<vmem>>, vector<1x1x8xf32>
    %109 = vector.shape_cast %108 : vector<1x1x8xf32> to vector<1x8xf32>
    %110 = vector.broadcast %109 : vector<1x8xf32> to vector<8x8xf32>
    %111 = arith.addf %107, %110 : vector<8x8xf32>
    %112 = arith.truncf %111 : vector<8x8xf32> to vector<8x8xbf16>
    %c0_91 = arith.constant 0 : index
    %c3_92 = arith.constant 3 : index
    %c0_93 = arith.constant 0 : index
    %c0_94 = arith.constant 0 : index
    %113 = vector.load %arg9[%c0_91, %c3_92, %c0_93, %c0_94] : memref<1x4x8x8xbf16, #tpu.memory_space<vmem>>, vector<1x1x8x8xbf16>
    %114 = vector.shape_cast %113 : vector<1x1x8x8xbf16> to vector<8x8xbf16>
    %115 = vector.shape_cast %112 : vector<8x8xbf16> to vector<1x1x8x8xbf16>
    tpu.vector_store %arg9[%c0_91, %c3_92, %c0_93, %c0_94], %115 {strides = array<i32>} : memref<1x4x8x8xbf16, #tpu.memory_space<vmem>>, vector<1x1x8x8xbf16>,
    return
  }
  func.func @transform_0(%arg0: i32) -> (i32, i32, i32) {
    %c0_i32 = arith.constant 0 : i32
    %c0_i32_0 = arith.constant 0 : i32
    %c0_i32_1 = arith.constant 0 : i32
    return %arg0, %c0_i32, %c0_i32_0 : i32, i32, i32
  }
  func.func @transform_1(%arg0: i32) -> (i32, i32) {
    %c0_i32 = arith.constant 0 : i32
    %c0_i32_0 = arith.constant 0 : i32
    %c0_i32_1 = arith.constant 0 : i32
    return %c0_i32, %c0_i32_0 : i32, i32
  }
  func.func @transform_2(%arg0: i32) -> (i32, i32) {
    %c0_i32 = arith.constant 0 : i32
    %c0_i32_0 = arith.constant 0 : i32
    %c0_i32_1 = arith.constant 0 : i32
    return %c0_i32, %c0_i32_0 : i32, i32
  }
  func.func @transform_3(%arg0: i32) -> (i32, i32, i32) {
    %c0_i32 = arith.constant 0 : i32
    %c0_i32_0 = arith.constant 0 : i32
    %c0_i32_1 = arith.constant 0 : i32
    %c0_i32_2 = arith.constant 0 : i32
    return %c0_i32, %c0_i32_0, %c0_i32_1 : i32, i32, i32
  }
  func.func @transform_4(%arg0: i32) -> (i32, i32, i32) {
    %c0_i32 = arith.constant 0 : i32
    %c0_i32_0 = arith.constant 0 : i32
    %c0_i32_1 = arith.constant 0 : i32
    %c0_i32_2 = arith.constant 0 : i32
    return %c0_i32, %c0_i32_0, %c0_i32_1 : i32, i32, i32
  }
  func.func @transform_5(%arg0: i32) -> (i32, i32, i32) {
    %c0_i32 = arith.constant 0 : i32
    %c0_i32_0 = arith.constant 0 : i32
    %c0_i32_1 = arith.constant 0 : i32
    %c0_i32_2 = arith.constant 0 : i32
    return %c0_i32, %c0_i32_0, %c0_i32_1 : i32, i32, i32
  }
  func.func @transform_6(%arg0: i32) -> (i32, i32, i32) {
    %c0_i32 = arith.constant 0 : i32
    %c0_i32_0 = arith.constant 0 : i32
    %c0_i32_1 = arith.constant 0 : i32
    %c0_i32_2 = arith.constant 0 : i32
    return %c0_i32, %c0_i32_0, %c0_i32_1 : i32, i32, i32
  }
  func.func @transform_7(%arg0: i32) -> (i32, i32, i32, i32) {
    %c0_i32 = arith.constant 0 : i32
    %c0_i32_0 = arith.constant 0 : i32
    %c0_i32_1 = arith.constant 0 : i32
    %c0_i32_2 = arith.constant 0 : i32
    return %arg0, %c0_i32, %c0_i32_0, %c0_i32_1 : i32, i32, i32, i32
  }
  func.func @transform_8(%arg0: i32) -> (i32, i32, i32, i32) {
    %c0_i32 = arith.constant 0 : i32
    %c0_i32_0 = arith.constant 0 : i32
    %c0_i32_1 = arith.constant 0 : i32
    %c0_i32_2 = arith.constant 0 : i32
    return %arg0, %c0_i32, %c0_i32_0, %c0_i32_1 : i32, i32, i32, i32
  }
}

</mosaic_0001>

<llo_original>
// kernel: tpu_custom_call.1
$region0: #{tpu_custom_call.1}
  #allocation0 [shape = 'u32[]', space=smem, size = 0x4, offset = 0x4, fixed_abs, tag = 'smem constant byte address 0x4 - core index']
  #allocation1 [shape = 'u32[72,128]{1,0:T(1,128)}', space=vmem, size = 0x9000, scoped, tag = 'internal scratch']
  %s0 = inlined_call_operand.vmem [shape: bf16[2,8,32], index: 0, kind: input, shape index: {}]
  %s1 = inlined_call_operand.vmem [shape: f32[1,32], index: 1, kind: input, shape index: {}]
  %s2 = inlined_call_operand.vmem [shape: f32[1,32], index: 2, kind: input, shape index: {}]
  %s3 = inlined_call_operand.vmem [shape: bf16[4,32,8], index: 3, kind: input, shape index: {}]
  %s4 = inlined_call_operand.vmem [shape: f32[4,1,8], index: 4, kind: input, shape index: {}]
  %s5 = inlined_call_operand.vmem [shape: bf16[4,32,8], index: 5, kind: input, shape index: {}]
  %s6 = inlined_call_operand.vmem [shape: f32[4,1,8], index: 6, kind: input, shape index: {}]
  %s7 = inlined_call_operand.hbm [shape: bf16[2,4,8,8], index: 7, kind: output, shape index: {0}]
  %s8 = inlined_call_operand.hbm [shape: bf16[2,4,8,8], index: 8, kind: output, shape index: {1}]
  %9 = xla_tuple %s7, %s8
  %s10 = sld [smem:[#allocation0]]
  $region69: #{tpu_custom_call.1} parent=0
    _
  %s12 = ssub.s32 1, %s10
  %s13 = scalar_select 0, %s12, %s10
  $region1: #{tpu_custom_call.1} parent=0
    #allocation2 [shape = 'u8[16384]{0}', space=vmem, size = 0x4000, scoped, tag = 'output window, operand 0']
    #allocation3 [shape = 's32[2]{0}', space=sflag, size = 0x8, scoped, tag = 'scoped memory for tpu_custom_call.1']
    #allocation4 [shape = 'u8[16384]{0}', space=vmem, size = 0x4000, scoped, tag = 'output window, operand 1']
    #allocation5 [shape = 's32[2]{0}', space=sflag, size = 0x8, scoped, tag = 'scoped memory for tpu_custom_call.1']
    %14 = vsyncpa [#allocation3], 0
    %s15 = scalar_lea.sflag [#allocation3], 1
    %16 = vsyncpa %s15, 0
    %17 = vsyncpa [#allocation5], 0
    %s18 = scalar_lea.sflag [#allocation5], 1
    %19 = vsyncpa %s18, 0
    loop: start=0, step=1, limit=4
    $region2: #{tpu_custom_call.1} parent=1 // loop_pre_header
      _
    $region3: #{tpu_custom_call.1} parent=1 // loop_header
      %s21 = sphi 0, %s25
      %p22 = scmp.ge.s32.totalorder %s21, 4
      %s31 = sphi 0, %s33
      %s34 = sphi 0, %s31
      %s35 = sphi 0, %s34
      %s51 = sphi 0, %s35
      %s55 = sphi 0, %s55
      %s57 = sphi 0, %s55
      %s58 = sphi 0, %s57
      %s72 = sphi 0, %s58
      %s76 = sphi 0, %s76
      %s78 = sphi 0, %s76
      %s79 = sphi 0, %s78
      %s93 = sphi 0, %s79
      %s97 = sphi 0, %s97
      %s99 = sphi 0, %s97
      %s100 = sphi 0, %s99
      %s114 = sphi 0, %s100
      %s118 = sphi 0, %s118
      %s120 = sphi 0, %s118
      %s121 = sphi 0, %s120
      %s135 = sphi 0, %s121
      %s139 = sphi 0, %s139
      %s141 = sphi 0, %s139
      %s142 = sphi 0, %s141
      %s156 = sphi 0, %s142
      %s160 = sphi 0, %s160
      %s162 = sphi 0, %s160
      %s163 = sphi 0, %s162
      %s177 = sphi 0, %s163
      %s183 = sphi 0, %s185
      %s186 = sphi 0, %s183
      %s187 = sphi 0, %s186
      %s203 = sphi 0, %s187
      %s209 = sphi 0, %s211
      %s212 = sphi 0, %s209
      %s213 = sphi 0, %s212
      %s229 = sphi 0, %s213
    $region4: #{tpu_custom_call.1} parent=1 // loop_header_branch
      %24 = sbr.rel (%p22) target = $region8
    $region5: #{tpu_custom_call.1} parent=1 // loop_body
      %s26 = ssub.s32 %s21, 1
      %s27 = ssub.s32 %s21, 2
      %s28 = sadd.s32 %s21, 1
      %s29 = ssub.s32 %s21, %s28
      %p30 = scmp.eq.s32.totalorder %s29, 0
      %s32 = sadd.s32 %s31, 1
      %s33 = scalar_select %p30, %s31, %s32
      %p36 = pneg %p30
      %p37 = scmp.eq.s32.totalorder %s21, 1
      %p38 = por %p36, %p37
      %p39 = scmp.ne.s32.totalorder %s31, %s34
      %p40 = scmp.eq.s32.totalorder %s21, 0
      %p41 = por %p39, %p40
      %p42 = scmp.ne.s32.totalorder %s31, %s34
      %p43 = scmp.eq.s32.totalorder %s26, 1
      %p44 = por %p42, %p43
      %p45 = scmp.ne.s32.totalorder %s34, %s35
      %p46 = scmp.eq.s32.totalorder %s26, 0
      %p47 = por %p45, %p46
      %p48 = scmp.ne.s32.totalorder %s34, %s35
      %p49 = scmp.eq.s32.totalorder %s27, 1
      %p50 = por %p48, %p49
      %p52 = scmp.ne.s32.totalorder %s35, %s51
      %p53 = scmp.eq.s32.totalorder %s27, 0
      %p54 = por %p52, %p53
      %s56 = sadd.s32 %s55, 1
      %p59 = scmp.eq.s32.totalorder %s21, 1
      %p60 = scmp.ne.s32.totalorder %s55, %s57
      %p61 = scmp.eq.s32.totalorder %s21, 0
      %p62 = por %p60, %p61
      %p63 = scmp.ne.s32.totalorder %s55, %s57
      %p64 = scmp.eq.s32.totalorder %s26, 1
      %p65 = por %p63, %p64
      %p66 = scmp.ne.s32.totalorder %s57, %s58
      %p67 = scmp.eq.s32.totalorder %s26, 0
      %p68 = por %p66, %p67
      %p69 = scmp.ne.s32.totalorder %s57, %s58
      %p70 = scmp.eq.s32.totalorder %s27, 1
      %p71 = por %p69, %p70
      %p73 = scmp.ne.s32.totalorder %s58, %s72
      %p74 = scmp.eq.s32.totalorder %s27, 0
      %p75 = por %p73, %p74
      %s77 = sadd.s32 %s76, 1
      %p80 = scmp.eq.s32.totalorder %s21, 1
      %p81 = scmp.ne.s32.totalorder %s76, %s78
      %p82 = scmp.eq.s32.totalorder %s21, 0
      %p83 = por %p81, %p82
      %p84 = scmp.ne.s32.totalorder %s76, %s78
      %p85 = scmp.eq.s32.totalorder %s26, 1
      %p86 = por %p84, %p85
      %p87 = scmp.ne.s32.totalorder %s78, %s79
      %p88 = scmp.eq.s32.totalorder %s26, 0
      %p89 = por %p87, %p88
      %p90 = scmp.ne.s32.totalorder %s78, %s79
      %p91 = scmp.eq.s32.totalorder %s27, 1
      %p92 = por %p90, %p91
      %p94 = scmp.ne.s32.totalorder %s79, %s93
      %p95 = scmp.eq.s32.totalorder %s27, 0
      %p96 = por %p94, %p95
      %s98 = sadd.s32 %s97, 1
      %p101 = scmp.eq.s32.totalorder %s21, 1
      %p102 = scmp.ne.s32.totalorder %s97, %s99
      %p103 = scmp.eq.s32.totalorder %s21, 0
      %p104 = por %p102, %p103
      %p105 = scmp.ne.s32.totalorder %s97, %s99
      %p106 = scmp.eq.s32.totalorder %s26, 1
      %p107 = por %p105, %p106
      %p108 = scmp.ne.s32.totalorder %s99, %s100
      %p109 = scmp.eq.s32.totalorder %s26, 0
      %p110 = por %p108, %p109
      %p111 = scmp.ne.s32.totalorder %s99, %s100
      %p112 = scmp.eq.s32.totalorder %s27, 1
      %p113 = por %p111, %p112
      %p115 = scmp.ne.s32.totalorder %s100, %s114
      %p116 = scmp.eq.s32.totalorder %s27, 0
      %p117 = por %p115, %p116
      %s119 = sadd.s32 %s118, 1
      %p122 = scmp.eq.s32.totalorder %s21, 1
      %p123 = scmp.ne.s32.totalorder %s118, %s120
      %p124 = scmp.eq.s32.totalorder %s21, 0
      %p125 = por %p123, %p124
      %p126 = scmp.ne.s32.totalorder %s118, %s120
      %p127 = scmp.eq.s32.totalorder %s26, 1
      %p128 = por %p126, %p127
      %p129 = scmp.ne.s32.totalorder %s120, %s121
      %p130 = scmp.eq.s32.totalorder %s26, 0
      %p131 = por %p129, %p130
      %p132 = scmp.ne.s32.totalorder %s120, %s121
      %p133 = scmp.eq.s32.totalorder %s27, 1
      %p134 = por %p132, %p133
      %p136 = scmp.ne.s32.totalorder %s121, %s135
      %p137 = scmp.eq.s32.totalorder %s27, 0
      %p138 = por %p136, %p137
      %s140 = sadd.s32 %s139, 1
      %p143 = scmp.eq.s32.totalorder %s21, 1
      %p144 = scmp.ne.s32.totalorder %s139, %s141
      %p145 = scmp.eq.s32.totalorder %s21, 0
      %p146 = por %p144, %p145
      %p147 = scmp.ne.s32.totalorder %s139, %s141
      %p148 = scmp.eq.s32.totalorder %s26, 1
      %p149 = por %p147, %p148
      %p150 = scmp.ne.s32.totalorder %s141, %s142
      %p151 = scmp.eq.s32.totalorder %s26, 0
      %p152 = por %p150, %p151
      %p153 = scmp.ne.s32.totalorder %s141, %s142
      %p154 = scmp.eq.s32.totalorder %s27, 1
      %p155 = por %p153, %p154
      %p157 = scmp.ne.s32.totalorder %s142, %s156
      %p158 = scmp.eq.s32.totalorder %s27, 0
      %p159 = por %p157, %p158
      %s161 = sadd.s32 %s160, 1
      %p164 = scmp.eq.s32.totalorder %s21, 1
      %p165 = scmp.ne.s32.totalorder %s160, %s162
      %p166 = scmp.eq.s32.totalorder %s21, 0
      %p167 = por %p165, %p166
      %p168 = scmp.ne.s32.totalorder %s160, %s162
      %p169 = scmp.eq.s32.totalorder %s26, 1
      %p170 = por %p168, %p169
      %p171 = scmp.ne.s32.totalorder %s162, %s163
      %p172 = scmp.eq.s32.totalorder %s26, 0
      %p173 = por %p171, %p172
      %p174 = scmp.ne.s32.totalorder %s162, %s163
      %p175 = scmp.eq.s32.totalorder %s27, 1
      %p176 = por %p174, %p175
      %p178 = scmp.ne.s32.totalorder %s163, %s177
      %p179 = scmp.eq.s32.totalorder %s27, 0
      %p180 = por %p178, %p179
      %s181 = ssub.s32 %s21, %s28
      %p182 = scmp.eq.s32.totalorder %s181, 0
      %s184 = sadd.s32 %s183, 1
      %s185 = scalar_select %p182, %s183, %s184
      %p188 = pneg %p182
      %p189 = scmp.eq.s32.totalorder %s21, 1
      %p190 = por %p188, %p189
      %p191 = scmp.ne.s32.totalorder %s183, %s186
      %p192 = scmp.eq.s32.totalorder %s21, 0
      %p193 = por %p191, %p192
      %p194 = scmp.ne.s32.totalorder %s183, %s186
      %p195 = scmp.eq.s32.totalorder %s26, 1
      %p196 = por %p194, %p195
      %p197 = scmp.ne.s32.totalorder %s186, %s187
      %p198 = scmp.eq.s32.totalorder %s26, 0
      %p199 = por %p197, %p198
      %p200 = scmp.ne.s32.totalorder %s186, %s187
      %p201 = scmp.eq.s32.totalorder %s27, 1
      %p202 = por %p200, %p201
      %p204 = scmp.ne.s32.totalorder %s187, %s203
      %p205 = scmp.eq.s32.totalorder %s27, 0
      %p206 = por %p204, %p205
      %s207 = ssub.s32 %s21, %s28
      %p208 = scmp.eq.s32.totalorder %s207, 0
      %s210 = sadd.s32 %s209, 1
      %s211 = scalar_select %p208, %s209, %s210
      %p214 = pneg %p208
      %p215 = scmp.eq.s32.totalorder %s21, 1
      %p216 = por %p214, %p215
      %p217 = scmp.ne.s32.totalorder %s209, %s212
      %p218 = scmp.eq.s32.totalorder %s21, 0
      %p219 = por %p217, %p218
      %p220 = scmp.ne.s32.totalorder %s209, %s212
      %p221 = scmp.eq.s32.totalorder %s26, 1
      %p222 = por %p220, %p221
      %p223 = scmp.ne.s32.totalorder %s212, %s213
      %p224 = scmp.eq.s32.totalorder %s26, 0
      %p225 = por %p223, %p224
      %p226 = scmp.ne.s32.totalorder %s212, %s213
      %p227 = scmp.eq.s32.totalorder %s27, 1
      %p228 = por %p226, %p227
      %p230 = scmp.ne.s32.totalorder %s213, %s229
      %p231 = scmp.eq.s32.totalorder %s27, 0
      %p232 = por %p230, %p231
      %p233 = scmp.le.s32.totalorder 1, %s21
      %p234 = scmp.lt.s32.totalorder %s21, 3
      %p235 = pnand %p233, %p234
      %p236 = pneg %p235
      // Predicated region
      $region9: #{tpu_custom_call.1} parent=5 // pred_check
        _
      $region10: #{tpu_custom_call.1} parent=5 // pred_check_branch
        %238 = sbr.rel (%p235) target = $region12
      $region11: #{tpu_custom_call.1} parent=5 // pred_region
        %s239 = ssub.s32 %s21, 1
        // Predicated region
        $region13: #{tpu_custom_call.1} parent=11 // pred_check
          %p240 = pneg %p68
        $region14: #{tpu_custom_call.1} parent=11 // pred_check_branch
          %242 = sbr.rel (%p240) target = $region16
        $region15: #{tpu_custom_call.1} parent=11 // pred_region
          _
        $region16: #{tpu_custom_call.1} parent=11 // pred_fallthru
          _
        // Predicated region
        $region17: #{tpu_custom_call.1} parent=11 // pred_check
          %p243 = pneg %p89
        $region18: #{tpu_custom_call.1} parent=11 // pred_check_branch
          %245 = sbr.rel (%p243) target = $region20
        $region19: #{tpu_custom_call.1} parent=11 // pred_region
          _
        $region20: #{tpu_custom_call.1} parent=11 // pred_fallthru
          _
        // Predicated region
        $region21: #{tpu_custom_call.1} parent=11 // pred_check
          %p246 = pneg %p110
        $region22: #{tpu_custom_call.1} parent=11 // pred_check_branch
          %248 = sbr.rel (%p246) target = $region24
        $region23: #{tpu_custom_call.1} parent=11 // pred_region
          _
        $region24: #{tpu_custom_call.1} parent=11 // pred_fallthru
          _
        // Predicated region
        $region25: #{tpu_custom_call.1} parent=11 // pred_check
          %p249 = pneg %p131
        $region26: #{tpu_custom_call.1} parent=11 // pred_check_branch
          %251 = sbr.rel (%p249) target = $region28
        $region27: #{tpu_custom_call.1} parent=11 // pred_region
          _
        $region28: #{tpu_custom_call.1} parent=11 // pred_fallthru
          _
        // Predicated region
        $region29: #{tpu_custom_call.1} parent=11 // pred_check
          %p252 = pneg %p152
        $region30: #{tpu_custom_call.1} parent=11 // pred_check_branch
          %254 = sbr.rel (%p252) target = $region32
        $region31: #{tpu_custom_call.1} parent=11 // pred_region
          _
        $region32: #{tpu_custom_call.1} parent=11 // pred_fallthru
          _
        // Predicated region
        $region33: #{tpu_custom_call.1} parent=11 // pred_check
          %p255 = pneg %p173
        $region34: #{tpu_custom_call.1} parent=11 // pred_check_branch
          %257 = sbr.rel (%p255) target = $region36
        $region35: #{tpu_custom_call.1} parent=11 // pred_region
          _
        $region36: #{tpu_custom_call.1} parent=11 // pred_fallthru
          _
      $region12: #{tpu_custom_call.1} parent=5 // pred_fallthru
        _
      %p258 = scmp.lt.s32.totalorder %s21, 2
      // Predicated region
      $region37: #{tpu_custom_call.1} parent=5 // pred_check
        %p259 = pneg %p258
      $region38: #{tpu_custom_call.1} parent=5 // pred_check_branch
        %261 = sbr.rel (%p259) target = $region40
      $region39: #{tpu_custom_call.1} parent=5 // pred_region
        // Predicated region
        $region41: #{tpu_custom_call.1} parent=39 // pred_check
          %p262 = pneg %p41
        $region42: #{tpu_custom_call.1} parent=39 // pred_check_branch
          %264 = sbr.rel (%p262) target = $region44
        $region43: #{tpu_custom_call.1} parent=39 // pred_region
          %p265 = scmp.lt.s32.totalorder %s21, 1
          %s266 = scalar_select %p265, %s21, 1
          %s267 = smul.addr %s266, 4
          %s268 = scalar_lea.vmem %s0, %s267
        $region44: #{tpu_custom_call.1} parent=39 // pred_fallthru
          _
      $region40: #{tpu_custom_call.1} parent=5 // pred_fallthru
        _
      %p269 = scmp.le.s32.totalorder 1, %s21
      %p270 = scmp.lt.s32.totalorder %s21, 3
      %p271 = pnand %p269, %p270
      %p272 = pneg %p271
      // Predicated region
      $region45: #{tpu_custom_call.1} parent=5 // pred_check
        _
      $region46: #{tpu_custom_call.1} parent=5 // pred_check_branch
        %274 = sbr.rel (%p271) target = $region48
      $region47: #{tpu_custom_call.1} parent=5 // pred_region
        %s275 = ssub.s32 %s21, 1
        %p276 = scmp.lt.s32.totalorder %s26, 1
        %s277 = scalar_select %p276, %s26, 1
        %s278 = smul.addr %s277, 4
        %s279 = scalar_lea.vmem %s0, %s278
        %p280 = pneg %p47
        %p281 = pneg %p44
        %p282 = pneg %p68
        %p283 = pneg %p65
        %p284 = pneg %p89
        %p285 = pneg %p86
        %p286 = pneg %p110
        %p287 = pneg %p107
        %p288 = pneg %p131
        %p289 = pneg %p128
        %p290 = pneg %p152
        %p291 = pneg %p149
        %p292 = pneg %p173
        %p293 = pneg %p170
        %p294 = pneg %p199
        %p295 = pneg %p196
        %s296 = sand.u32 %s186, 1
        %s297 = scalar_lea.sflag [#allocation3], %s296
        %s298 = sand.u32 %s186, 1
        %s299 = smul.addr %s298, 16
        %s300 = scalar_lea.vmem [#allocation2], %s299
        %p301 = pneg %p225
        %p302 = pneg %p222
        %s303 = sand.u32 %s212, 1
        %s304 = scalar_lea.sflag [#allocation5], %s303
        %s305 = sand.u32 %s212, 1
        %s306 = smul.addr %s305, 16
        %s307 = scalar_lea.vmem [#allocation4], %s306
        %p308 = scmp.lt.s32.totalorder %s26, 1
        %s309 = scalar_select %p308, %s26, 1
        %s310 = smul.addr %s309, 4
        %s311 = scalar_lea.vmem %s0, %s310
        %v313 = vld [vmem:[%s311] sm:$0xf]
        %v314 = vunpack.c.l.bf16 %v313
        %v315 = vld [vmem:[%s1] sm:$0x1]
        %v316 = vld [vmem:[%s2] sm:$0x1]
        %vm317 = vcmask 261120
        %v318 = vsel %vm317, %v314, 0.0
        %319 = vadd.xlane.f32.xlu0 %v318
        %v320 = vpop.xlane.xlu0 %319
        %v321 = vrcp.pop 32.0
        %v322 = vmul.f32 32.0, %v321
        %v323 = vsub.f32 1.0, %v322
        %v324 = vmul.f32 %v321, %v323
        %v325 = vadd.f32 %v321, %v324
        %vm326 = vweird.f32 %v321
        %v327 = vsel %vm326, %v321, %v325
        %v328 = vmul.f32 %v320, %v327
        %v329 = vsub.f32 %v314, %v328
        %v330 = vmul.f32 %v329, %v329
        %v331 = vsel %vm317, %v330, 0.0
        %332 = vadd.xlane.f32.xlu0 %v331
        %v333 = vpop.xlane.xlu0 %332
        %v334 = vmul.f32 %v333, %v327
        %v335 = vadd.f32 %v334, 1e-05
        %v336 = vrsqrt.pop %v335
        %v337 = vmul.f32 %v336, %v335
        %v338 = vmul.f32 %v337, %v336
        %v339 = vmul.f32 0.5, %v338
        %v340 = vsub.f32 1.5, %v339
        %v341 = vmul.f32 %v336, %v340
        %vm342 = vweird.f32 %v335
        %vm343 = vweird.f32 %v336
        %vm344 = vmor %vm342, %vm343
        %v345 = vsel %vm344, %v336, %v341
        %v346 = vmul.f32 %v329, %v345
        %v348 = vperm.slane %v315, 0
        %v350 = vmul.f32 %v346, %v348
        %v352 = vperm.slane %v316, 0
        %v354 = vadd.f32 %v350, %v352
        %v355 = vpack.c.bf16 %v354, %v354
        %v356 = vld [vmem:[%s3] sm:$0xf]
        %v357 = vld [vmem:[%s3 + $0x4] sm:$0xf]
        %v358 = vld [vmem:[%s3 + $0x8] sm:$0xf]
        %v359 = vld [vmem:[%s3 + $0xc] sm:$0xf]
        %v360 = vld [vmem:[%s4] sm:$0x1]
        %v362 = vperm.slane %v360, 0
        %v368 = vunpack.c.l.b16 %v356
        %v369 = vunpack.c.l.b16 %v357
        %v370 = vunpack.c.l.b16 %v358
        %v371 = vunpack.c.l.b16 %v359
        %v372 = vpack.c.b16 %v369, %v368
        %v373 = vpack.c.b16 %v371, %v370
        %v377 = vsel %vm317, %v355, 0
        %379 = vmatpush.bf16.msra.mxu0 0
        %380 = vmatpush.bf16.msra.mxu0 0
        %381 = vmatpush.bf16.msra.mxu0 0
        %382 = vmatpush.bf16.msra.mxu0 0
        %383 = vmatpush.bf16.msra.mxu0 0
        %384 = vmatpush.bf16.msra.mxu0 0
        %385 = vmatpush.bf16.msra.mxu0 %v373
        %386 = vmatpush.bf16.msra.mxu0 %v372
        %387 = vmatmul.bf16.gmra.mxu0 %v377
        %v388 = vpop.f32.mrf.mxu0
        %v389 = vadd.f32 %v362, %v388
        %v390 = vpop.f32.mrf.mxu0
        %391 = vdwg.mxu0
        %v392 = vpack.c.bf16 %v389, %v389
        %vm393 = vcmask 60416
        %394 = vst.msk [vmem:[%s300] sm:$0xf] %vm393, %v392
        %v395 = vld [vmem:[%s5] sm:$0xf]
        %v396 = vld [vmem:[%s5 + $0x4] sm:$0xf]
        %v397 = vld [vmem:[%s5 + $0x8] sm:$0xf]
        %v398 = vld [vmem:[%s5 + $0xc] sm:$0xf]
        %v399 = vld [vmem:[%s6] sm:$0x1]
        %v401 = vperm.slane %v399, 0
        %v407 = vunpack.c.l.b16 %v395
        %v408 = vunpack.c.l.b16 %v396
        %v409 = vunpack.c.l.b16 %v397
        %v410 = vunpack.c.l.b16 %v398
        %v411 = vpack.c.b16 %v408, %v407
        %v412 = vpack.c.b16 %v410, %v409
        %415 = vmatpush.bf16.msra.mxu0 0
        %416 = vmatpush.bf16.msra.mxu0 0
        %417 = vmatpush.bf16.msra.mxu0 0
        %418 = vmatpush.bf16.msra.mxu0 0
        %419 = vmatpush.bf16.msra.mxu0 0
        %420 = vmatpush.bf16.msra.mxu0 0
        %421 = vmatpush.bf16.msra.mxu0 %v412
        %422 = vmatpush.bf16.msra.mxu0 %v411
        %423 = vmatmul.bf16.gmra.mxu0 %v377
        %v424 = vpop.f32.mrf.mxu0
        %v425 = vadd.f32 %v401, %v424
        %v426 = vpop.f32.mrf.mxu0
        %427 = vdwg.mxu0
        %v428 = vpack.c.bf16 %v425, %v425
        %429 = vst.msk [vmem:[%s307] sm:$0xf] %vm393, %v428
        %s430 = scalar_lea.vmem %s3, 16
        %v431 = vld [vmem:[%s430] sm:$0xf]
        %v432 = vld [vmem:[%s430 + $0x4] sm:$0xf]
        %v433 = vld [vmem:[%s430 + $0x8] sm:$0xf]
        %v434 = vld [vmem:[%s430 + $0xc] sm:$0xf]
        %s435 = scalar_lea.vmem %s4, 1
        %v436 = vld [vmem:[%s435] sm:$0x1]
        %v438 = vperm.slane %v436, 0
        %v444 = vunpack.c.l.b16 %v431
        %v445 = vunpack.c.l.b16 %v432
        %v446 = vunpack.c.l.b16 %v433
        %v447 = vunpack.c.l.b16 %v434
        %v448 = vpack.c.b16 %v445, %v444
        %v449 = vpack.c.b16 %v447, %v446
        %452 = vmatpush.bf16.msra.mxu0 0
        %453 = vmatpush.bf16.msra.mxu0 0
        %454 = vmatpush.bf16.msra.mxu0 0
        %455 = vmatpush.bf16.msra.mxu0 0
        %456 = vmatpush.bf16.msra.mxu0 0
        %457 = vmatpush.bf16.msra.mxu0 0
        %458 = vmatpush.bf16.msra.mxu0 %v449
        %459 = vmatpush.bf16.msra.mxu0 %v448
        %460 = vmatmul.bf16.gmra.mxu0 %v377
        %v461 = vpop.f32.mrf.mxu0
        %v462 = vadd.f32 %v438, %v461
        %v463 = vpop.f32.mrf.mxu0
        %464 = vdwg.mxu0
        %v465 = vpack.c.bf16 %v462, %v462
        %s466 = scalar_lea.vmem %s300, 4 [#allocation2]
        %467 = vst.msk [vmem:[%s466] sm:$0xf] %vm393, %v465
        %s468 = scalar_lea.vmem %s5, 16
        %v469 = vld [vmem:[%s468] sm:$0xf]
        %v470 = vld [vmem:[%s468 + $0x4] sm:$0xf]
        %v471 = vld [vmem:[%s468 + $0x8] sm:$0xf]
        %v472 = vld [vmem:[%s468 + $0xc] sm:$0xf]
        %s473 = scalar_lea.vmem %s6, 1
        %v474 = vld [vmem:[%s473] sm:$0x1]
        %v476 = vperm.slane %v474, 0
        %v482 = vunpack.c.l.b16 %v469
        %v483 = vunpack.c.l.b16 %v470
        %v484 = vunpack.c.l.b16 %v471
        %v485 = vunpack.c.l.b16 %v472
        %v486 = vpack.c.b16 %v483, %v482
        %v487 = vpack.c.b16 %v485, %v484
        %490 = vmatpush.bf16.msra.mxu0 0
        %491 = vmatpush.bf16.msra.mxu0 0
        %492 = vmatpush.bf16.msra.mxu0 0
        %493 = vmatpush.bf16.msra.mxu0 0
        %494 = vmatpush.bf16.msra.mxu0 0
        %495 = vmatpush.bf16.msra.mxu0 0
        %496 = vmatpush.bf16.msra.mxu0 %v487
        %497 = vmatpush.bf16.msra.mxu0 %v486
        %498 = vmatmul.bf16.gmra.mxu0 %v377
        %v499 = vpop.f32.mrf.mxu0
        %v500 = vadd.f32 %v476, %v499
        %v501 = vpop.f32.mrf.mxu0
        %502 = vdwg.mxu0
        %v503 = vpack.c.bf16 %v500, %v500
        %s504 = scalar_lea.vmem %s307, 4 [#allocation4]
        %505 = vst.msk [vmem:[%s504] sm:$0xf] %vm393, %v503
        %s506 = scalar_lea.vmem %s3, 32
        %v507 = vld [vmem:[%s506] sm:$0xf]
        %v508 = vld [vmem:[%s506 + $0x4] sm:$0xf]
        %v509 = vld [vmem:[%s506 + $0x8] sm:$0xf]
        %v510 = vld [vmem:[%s506 + $0xc] sm:$0xf]
        %s511 = scalar_lea.vmem %s4, 2
        %v512 = vld [vmem:[%s511] sm:$0x1]
        %v514 = vperm.slane %v512, 0
        %v520 = vunpack.c.l.b16 %v507
        %v521 = vunpack.c.l.b16 %v508
        %v522 = vunpack.c.l.b16 %v509
        %v523 = vunpack.c.l.b16 %v510
        %v524 = vpack.c.b16 %v521, %v520
        %v525 = vpack.c.b16 %v523, %v522
        %528 = vmatpush.bf16.msra.mxu0 0
        %529 = vmatpush.bf16.msra.mxu0 0
        %530 = vmatpush.bf16.msra.mxu0 0
        %531 = vmatpush.bf16.msra.mxu0 0
        %532 = vmatpush.bf16.msra.mxu0 0
        %533 = vmatpush.bf16.msra.mxu0 0
        %534 = vmatpush.bf16.msra.mxu0 %v525
        %535 = vmatpush.bf16.msra.mxu0 %v524
        %536 = vmatmul.bf16.gmra.mxu0 %v377
        %v537 = vpop.f32.mrf.mxu0
        %v538 = vadd.f32 %v514, %v537
        %v539 = vpop.f32.mrf.mxu0
        %540 = vdwg.mxu0
        %v541 = vpack.c.bf16 %v538, %v538
        %s542 = scalar_lea.vmem %s300, 8 [#allocation2]
        %543 = vst.msk [vmem:[%s542] sm:$0xf] %vm393, %v541
        %s544 = scalar_lea.vmem %s5, 32
        %v545 = vld [vmem:[%s544] sm:$0xf]
        %v546 = vld [vmem:[%s544 + $0x4] sm:$0xf]
        %v547 = vld [vmem:[%s544 + $0x8] sm:$0xf]
        %v548 = vld [vmem:[%s544 + $0xc] sm:$0xf]
        %s549 = scalar_lea.vmem %s6, 2
        %v550 = vld [vmem:[%s549] sm:$0x1]
        %v552 = vperm.slane %v550, 0
        %v558 = vunpack.c.l.b16 %v545
        %v559 = vunpack.c.l.b16 %v546
        %v560 = vunpack.c.l.b16 %v547
        %v561 = vunpack.c.l.b16 %v548
        %v562 = vpack.c.b16 %v559, %v558
        %v563 = vpack.c.b16 %v561, %v560
        %566 = vmatpush.bf16.msra.mxu0 0
        %567 = vmatpush.bf16.msra.mxu0 0
        %568 = vmatpush.bf16.msra.mxu0 0
        %569 = vmatpush.bf16.msra.mxu0 0
        %570 = vmatpush.bf16.msra.mxu0 0
        %571 = vmatpush.bf16.msra.mxu0 0
        %572 = vmatpush.bf16.msra.mxu0 %v563
        %573 = vmatpush.bf16.msra.mxu0 %v562
        %574 = vmatmul.bf16.gmra.mxu0 %v377
        %v575 = vpop.f32.mrf.mxu0
        %v576 = vadd.f32 %v552, %v575
        %v577 = vpop.f32.mrf.mxu0
        %578 = vdwg.mxu0
        %v579 = vpack.c.bf16 %v576, %v576
        %s580 = scalar_lea.vmem %s307, 8 [#allocation4]
        %581 = vst.msk [vmem:[%s580] sm:$0xf] %vm393, %v579
        %s582 = scalar_lea.vmem %s3, 48
        %v583 = vld [vmem:[%s582] sm:$0xf]
        %v584 = vld [vmem:[%s582 + $0x4] sm:$0xf]
        %v585 = vld [vmem:[%s582 + $0x8] sm:$0xf]
        %v586 = vld [vmem:[%s582 + $0xc] sm:$0xf]
        %s587 = scalar_lea.vmem %s4, 3
        %v588 = vld [vmem:[%s587] sm:$0x1]
        %v590 = vperm.slane %v588, 0
        %v596 = vunpack.c.l.b16 %v583
        %v597 = vunpack.c.l.b16 %v584
        %v598 = vunpack.c.l.b16 %v585
        %v599 = vunpack.c.l.b16 %v586
        %v600 = vpack.c.b16 %v597, %v596
        %v601 = vpack.c.b16 %v599, %v598
        %604 = vmatpush.bf16.msra.mxu0 0
        %605 = vmatpush.bf16.msra.mxu0 0
        %606 = vmatpush.bf16.msra.mxu0 0
        %607 = vmatpush.bf16.msra.mxu0 0
        %608 = vmatpush.bf16.msra.mxu0 0
        %609 = vmatpush.bf16.msra.mxu0 0
        %610 = vmatpush.bf16.msra.mxu0 %v601
        %611 = vmatpush.bf16.msra.mxu0 %v600
        %612 = vmatmul.bf16.gmra.mxu0 %v377
        %v613 = vpop.f32.mrf.mxu0
        %v614 = vadd.f32 %v590, %v613
        %v615 = vpop.f32.mrf.mxu0
        %616 = vdwg.mxu0
        %v617 = vpack.c.bf16 %v614, %v614
        %s618 = scalar_lea.vmem %s300, 12 [#allocation2]
        %619 = vst.msk [vmem:[%s618] sm:$0xf] %vm393, %v617
        %s620 = scalar_lea.vmem %s5, 48
        %v621 = vld [vmem:[%s620] sm:$0xf]
        %v622 = vld [vmem:[%s620 + $0x4] sm:$0xf]
        %v623 = vld [vmem:[%s620 + $0x8] sm:$0xf]
        %v624 = vld [vmem:[%s620 + $0xc] sm:$0xf]
        %s625 = scalar_lea.vmem %s6, 3
        %v626 = vld [vmem:[%s625] sm:$0x1]
        %v628 = vperm.slane %v626, 0
        %v634 = vunpack.c.l.b16 %v621
        %v635 = vunpack.c.l.b16 %v622
        %v636 = vunpack.c.l.b16 %v623
        %v637 = vunpack.c.l.b16 %v624
        %v638 = vpack.c.b16 %v635, %v634
        %v639 = vpack.c.b16 %v637, %v636
        %642 = vmatpush.bf16.msra.mxu0 0
        %643 = vmatpush.bf16.msra.mxu0 0
        %644 = vmatpush.bf16.msra.mxu0 0
        %645 = vmatpush.bf16.msra.mxu0 0
        %646 = vmatpush.bf16.msra.mxu0 0
        %647 = vmatpush.bf16.msra.mxu0 0
        %648 = vmatpush.bf16.msra.mxu0 %v639
        %649 = vmatpush.bf16.msra.mxu0 %v638
        %650 = vmatmul.bf16.gmra.mxu0 %v377
        %v651 = vpop.f32.mrf.mxu0
        %v652 = vadd.f32 %v628, %v651
        %v653 = vpop.f32.mrf.mxu0
        %654 = vdwg.mxu0
        %v655 = vpack.c.bf16 %v652, %v652
        %s656 = scalar_lea.vmem %s307, 12 [#allocation4]
        %657 = vst.msk [vmem:[%s656] sm:$0xf] %vm393, %v655
        %s658 = sand.u32 %s186, 1
        %s659 = scalar_lea.sflag [#allocation3], %s658
        %s660 = sand.u32 %s186, 1
        %s661 = smul.addr %s660, 16
        %s662 = scalar_lea.vmem [#allocation2], %s661
        %s663 = sand.u32 %s212, 1
        %s664 = scalar_lea.sflag [#allocation5], %s663
        %s665 = sand.u32 %s212, 1
        %s666 = smul.addr %s665, 16
        %s667 = scalar_lea.vmem [#allocation4], %s666
        // Predicated region
        $region49: #{tpu_custom_call.1} parent=47 // pred_check
          %p668 = pneg %p196
        $region50: #{tpu_custom_call.1} parent=47 // pred_check_branch
          %670 = sbr.rel (%p668) target = $region52
        $region51: #{tpu_custom_call.1} parent=47 // pred_region
          %672 = vsyncadd %s659, 0
          %s673 = smul.addr %s26, 4
          %s674 = smul.addr %s673, 4
          %s675 = scalar_lea.hbm %s7, %s674
          %s676 = sshll.u32 %s662, 4
          %s677 = int_to_ptr.vmem [resolvable:$true] %s676
          %s678 = sshll.u32 %s675, 4
          %s679 = int_to_ptr.hbm [resolvable:$true] %s678
          %684 = dma.vmem_to_hbm [thread:$0]  %s677, 256, %s679, %s659, 64, 64, 4
        $region52: #{tpu_custom_call.1} parent=47 // pred_fallthru
          _
        // Predicated region
        $region53: #{tpu_custom_call.1} parent=47 // pred_check
          %p685 = pneg %p222
        $region54: #{tpu_custom_call.1} parent=47 // pred_check_branch
          %687 = sbr.rel (%p685) target = $region56
        $region55: #{tpu_custom_call.1} parent=47 // pred_region
          %689 = vsyncadd %s664, 0
          %s690 = smul.addr %s26, 4
          %s691 = smul.addr %s690, 4
          %s692 = scalar_lea.hbm %s8, %s691
          %s693 = sshll.u32 %s667, 4
          %s694 = int_to_ptr.vmem [resolvable:$true] %s693
          %s695 = sshll.u32 %s692, 4
          %s696 = int_to_ptr.hbm [resolvable:$true] %s695
          %701 = dma.vmem_to_hbm [thread:$0]  %s694, 256, %s696, %s664, 64, 64, 4
        $region56: #{tpu_custom_call.1} parent=47 // pred_fallthru
          _
      $region48: #{tpu_custom_call.1} parent=5 // pred_fallthru
        _
      %p702 = scmp.le.s32.totalorder 2, %s21
      // Predicated region
      $region57: #{tpu_custom_call.1} parent=5 // pred_check
        %p703 = pneg %p702
      $region58: #{tpu_custom_call.1} parent=5 // pred_check_branch
        %705 = sbr.rel (%p703) target = $region60
      $region59: #{tpu_custom_call.1} parent=5 // pred_region
        %s706 = ssub.s32 %s21, 2
        // Predicated region
        $region61: #{tpu_custom_call.1} parent=59 // pred_check
          %p707 = pneg %p202
        $region62: #{tpu_custom_call.1} parent=59 // pred_check_branch
          %709 = sbr.rel (%p707) target = $region64
        $region63: #{tpu_custom_call.1} parent=59 // pred_region
          %s710 = sand.u32 %s187, 1
          %s711 = scalar_lea.sflag [#allocation3], %s710
          %s712 = sand.u32 %s187, 1
          %s713 = smul.addr %s712, 16
          %s714 = scalar_lea.vmem [#allocation2], %s713
          %716 = dma.done %s711, 256
        $region64: #{tpu_custom_call.1} parent=59 // pred_fallthru
          _
        // Predicated region
        $region65: #{tpu_custom_call.1} parent=59 // pred_check
          %p717 = pneg %p228
        $region66: #{tpu_custom_call.1} parent=59 // pred_check_branch
          %719 = sbr.rel (%p717) target = $region68
        $region67: #{tpu_custom_call.1} parent=59 // pred_region
          %s720 = sand.u32 %s213, 1
          %s721 = scalar_lea.sflag [#allocation5], %s720
          %s722 = sand.u32 %s213, 1
          %s723 = smul.addr %s722, 16
          %s724 = scalar_lea.vmem [#allocation4], %s723
          %726 = dma.done %s721, 256
        $region68: #{tpu_custom_call.1} parent=59 // pred_fallthru
          _
      $region60: #{tpu_custom_call.1} parent=5 // pred_fallthru
        _
    $region6: #{tpu_custom_call.1} parent=1 // loop_footer
      %s25 = sadd.s32 1, %s21
    $region7: #{tpu_custom_call.1} parent=1 // loop_footer_branch
      %20 = sbr.rel target = $region3
    $region8: #{tpu_custom_call.1} parent=1 // loop_exit
      _
    %727 = vsyncpa [#allocation3], 1
    %s728 = scalar_lea.sflag [#allocation3], 1
    %729 = vsyncpa %s728, 1
    %730 = vsyncpa [#allocation5], 1
    %s731 = scalar_lea.sflag [#allocation5], 1
    %732 = vsyncpa %s731, 1

</llo_original>
